<compile_context>
chip_gen: v5e
topology: v5e:2x2
jax: 0.10.0
libtpu: 0.0.40
codegen_flags: <defaults>
</compile_context>

<pallas_src>
from functools import partial

import jax
import jax.numpy as jnp
from jax.experimental import pallas as pl
from jax.experimental.pallas import tpu as pltpu

EPS = 1e-6  # the module's Normalize() uses eps=1e-06 explicitly


# ----------------------------- kernel ---------------------------------------

def _self_attn_kernel(x_ref, wqkv_ref, bqkv_ref, bp_ref, o_ref, *, C, HW):
    x = x_ref[0]                                  # (C, HWp) f32, raw input
    HWp = x.shape[-1]

    # GroupNorm(num_groups=1): single-pass stats over the whole (real) sample.
    # Padded columns are zero so they do not perturb the sums; divide by the
    # real element count.  Affine (gamma/beta) is folded into wqkv/bqkv.
    n = float(C * HW)
    s1 = jnp.sum(x)
    s2 = jnp.sum(x * x)
    mean = s1 / n
    var = jnp.maximum(s2 / n - mean * mean, 0.0)
    z = (x - mean) * jax.lax.rsqrt(var + EPS)     # (C, HWp) f32 elementwise

    # Fused q/k/v 1x1 convs == one channel matmul (bf16 operands, f32 acc).
    # q rows already carry C^-0.5; v rows already carry proj_out's weight.
    qkv = jnp.dot(wqkv_ref[...], z.astype(jnp.bfloat16),
                  preferred_element_type=jnp.float32) + bqkv_ref[...]  # (3C, HWp)
    q = qkv[:C].astype(jnp.bfloat16)              # (C, HWp)
    k = qkv[C:2 * C].astype(jnp.bfloat16)         # (C, HWp)
    v = qkv[2 * C:].astype(jnp.bfloat16)          # (C, HWp), proj_out folded in

    # scores[i, j] = sum_c q[c, i] * k[c, j]  (no explicit transpose)
    s = jax.lax.dot_general(q, k, (((0,), (0,)), ((), ())),
                            preferred_element_type=jnp.float32)        # (HWp, HWp)
    if HWp != HW:
        col = jax.lax.broadcasted_iota(jnp.int32, (1, HWp), 1)
        s = jnp.where(col < HW, s, -1e30)         # mask padded key columns

    s = s - jnp.max(s, axis=-1, keepdims=True)
    p = jnp.exp(s)
    p = p * pl.reciprocal(jnp.sum(p, axis=-1, keepdims=True), approx=True)

    # proj[c, i] = sum_j v[c, j] * p[i, j]  -> channel-major output directly.
    proj = jax.lax.dot_general(v, p.astype(jnp.bfloat16),
                               (((1,), (1,)), ((), ())),
                               preferred_element_type=jnp.float32)     # (C, HWp)

    o_ref[0] = x + proj + bp_ref[...]             # residual uses raw x


# ----------------------------- wrapper ---------------------------------------

def _vmem_limit_bytes(C, HWp):
    # rough: double-buffered f32 x/out + fused weights + f32 scores/probs (x2)
    # + qkv temporaries, with headroom.  Floor 32 MiB (v5e default is 16 MiB),
    # cap 56 MiB so we stay inside v7x's 64 MiB physical VMEM.
    est = 2 * (4 * C * HWp * 4)                   # x + out, double-buffered
    est += 2 * 3 * C * C + 4 * (3 * C + C)        # weights / biases
    est += 2 * 4 * HWp * HWp                      # s and p (f32)
    est += 3 * 4 * 3 * C * HWp                    # qkv + bf16 copies
    est = int(est * 1.5) + (4 << 20)
    return max(32 << 20, min(est, 56 << 20))


@jax.jit
def self_attention(x, params):
    """x: (B, C, H, W) float32; params: SelfAttention weights (PyTorch layout)."""
    B, C, H, W = x.shape
    HW = H * W
    HWp = ((HW + 127) // 128) * 128               # lane-dense spatial axis
    xf = x.reshape(B, C, HW).astype(jnp.float32)
    if HWp != HW:
        xf = jnp.pad(xf, ((0, 0), (0, 0), (0, HWp - HW)))

    scale = float(C) ** (-0.5)                    # matches int(c) ** (-0.5)
    gamma, beta = params["norm_g"], params["norm_b"]          # (C,), (C,)

    # Fold proj_out into v:  wp @ (wv @ hn + bv) = (wp@wv) @ hn + wp@bv
    wv_f = params["wp"] @ params["wv"]                         # (C, C)
    bv_f = params["wp"] @ (params["wv"] @ beta + params["bv"]) # (C,)

    # Fold the GroupNorm affine and the attention scale into the fused qkv op.
    w_cat = jnp.concatenate(
        [params["wq"] * scale, params["wk"], wv_f], axis=0)    # (3C, C)
    b_cat = jnp.concatenate(
        [(params["wq"] * scale) @ beta + params["bq"] * scale,
         params["wk"] @ beta + params["bk"],
         bv_f], axis=0)                                        # (3C,)
    w_eff = (w_cat * gamma[None, :]).astype(jnp.bfloat16)      # (3C, C) bf16
    b_eff = b_cat[:, None].astype(jnp.float32)                 # (3C, 1)
    bp = params["bp"][:, None].astype(jnp.float32)             # (C, 1)

    kernel = partial(_self_attn_kernel, C=C, HW=HW)
    out = pl.pallas_call(
        kernel,
        out_shape=jax.ShapeDtypeStruct((B, C, HWp), jnp.float32),
        grid=(B,),
        in_specs=[
            pl.BlockSpec((1, C, HWp), lambda b: (b, 0, 0)),    # x (per-sample)
            pl.BlockSpec((3 * C, C), lambda b: (0, 0)),        # fused qkv weight (bf16)
            pl.BlockSpec((3 * C, 1), lambda b: (0, 0)),        # fused qkv bias
            pl.BlockSpec((C, 1), lambda b: (0, 0)),            # proj_out bias
        ],
        out_specs=pl.BlockSpec((1, C, HWp), lambda b: (b, 0, 0)),
        compiler_params=pltpu.CompilerParams(
            dimension_semantics=("parallel",),
            vmem_limit_bytes=_vmem_limit_bytes(C, HWp),
        ),
    )(xf, w_eff, b_eff, bp)

    if HWp != HW:
        out = out[:, :, :HW]
    return out.reshape(B, C, H, W)


# ----------------------------- reference (pure JAX, f32) ----------------------

def self_attention_ref(x, params):
    B, C, H, W = x.shape
    xf = x.reshape(B, C, H * W).astype(jnp.float32)
    mean = jnp.mean(xf, axis=(1, 2), keepdims=True)
    var = jnp.mean((xf - mean) ** 2, axis=(1, 2), keepdims=True)
    hn = (xf - mean) / jnp.sqrt(var + EPS)
    hn = hn * params["norm_g"][None, :, None] + params["norm_b"][None, :, None]
    q = jnp.einsum("oc,bcs->bos", params["wq"], hn) + params["bq"][None, :, None]
    k = jnp.einsum("oc,bcs->bos", params["wk"], hn) + params["bk"][None, :, None]
    v = jnp.einsum("oc,bcs->bos", params["wv"], hn) + params["bv"][None, :, None]
    s = jnp.einsum("bci,bcj->bij", q, k) * (float(C) ** -0.5)
    p = jax.nn.softmax(s, axis=-1)
    out = jnp.einsum("bij,bcj->bci", p, v)
    proj = jnp.einsum("oc,bcs->bos", params["wp"], out) + params["bp"][None, :, None]
    return (xf + proj).reshape(B, C, H, W)


# ----------------------------- init & main -----------------------------------

def init_params(key, C):
    ks = iter(jax.random.split(key, 16))

    def w(shape, s=0.05):
        return jax.random.normal(next(ks), shape, jnp.float32) * s

    return {
        # GroupNorm affine (PyTorch default init: gamma=1, beta=0)
        "norm_g": jnp.ones((C,), jnp.float32),
        "norm_b": jnp.zeros((C,), jnp.float32),
        # 1x1 convs: weight (C_out, C_in), bias (C_out,)
        "wq": w((C, C)), "bq": w((C,)),
        "wk": w((C, C)), "bk": w((C,)),
        "wv": w((C, C)), "bv": w((C,)),
        "wp": w((C, C)), "bp": w((C,)),
    }


def _run_case(key, B, C, H, W, tol):
    kx, kp = jax.random.split(key, 2)
    x = jax.random.normal(kx, (B, C, H, W), jnp.float32)
    params = init_params(kp, C)

    out = jax.block_until_ready(self_attention(x, params))
    assert out.shape == (B, C, H, W), out.shape
    assert bool(jnp.all(jnp.isfinite(out)))

    ref = self_attention_ref(x, params)
    max_err = float(jnp.max(jnp.abs(out - ref)))
    # bf16 MXU operands dominate the error budget vs the f32 reference.
    assert max_err < tol, f"max abs err {max_err} (tol {tol})"


if __name__ == "__main__":
    key = jax.random.PRNGKey(0)
    k1, k2 = jax.random.split(key, 2)

    # Lane-dense case: HW = 8*16 = 128.
    _run_case(k1, B=2, C=16, H=8, W=16, tol=2e-2)
    # Padded case: HW = 64 -> padded to 128 with masked key columns.
    _run_case(k2, B=2, C=32, H=8, W=8, tol=2e-2)

    print("KERNEL_OK")
</pallas_src>

<mosaic_0001>
module attributes {stable_mosaic.version = 11 : i64} {
  func.func @_self_attn_kernel(%arg0: i32, %arg1: memref<1x16x128xf32, #tpu.memory_space<vmem>>, %arg2: memref<48x16xbf16, #tpu.memory_space<vmem>>, %arg3: memref<48x1xf32, #tpu.memory_space<vmem>>, %arg4: memref<16x1xf32, #tpu.memory_space<vmem>>, %arg5: memref<1x16x128xf32, #tpu.memory_space<vmem>>) attributes {dimension_semantics = [#tpu.dimension_semantics<parallel>], iteration_bounds = array<i64: 2>, scalar_prefetch = 0 : i64, scratch_operands = 0 : i64, tpu.core_type = #tpu.core_type<tc>, window_params = [{transform_indices = @transform_0, window_bounds = array<i64: 1, 16, 128>}, {pipeline_mode = #tpu.pipeline_mode<synchronous>, transform_indices = @transform_1, window_bounds = array<i64: 48, 16>}, {pipeline_mode = #tpu.pipeline_mode<synchronous>, transform_indices = @transform_2, window_bounds = array<i64: 48, 1>}, {pipeline_mode = #tpu.pipeline_mode<synchronous>, transform_indices = @transform_3, window_bounds = array<i64: 16, 1>}, {transform_indices = @transform_4, window_bounds = array<i64: 1, 16, 128>}]} {
    %c0 = arith.constant 0 : index
    %c0_0 = arith.constant 0 : index
    %c0_1 = arith.constant 0 : index
    %0 = vector.load %arg1[%c0, %c0_0, %c0_1] : memref<1x16x128xf32, #tpu.memory_space<vmem>>, vector<1x16x128xf32>
    %1 = vector.shape_cast %0 : vector<1x16x128xf32> to vector<16x128xf32>
    %2 = vector.shape_cast %1 : vector<16x128xf32> to vector<1x16x128xf32>
    %cst = arith.constant dense<0.000000e+00> : vector<1xf32>
    %3 = vector.multi_reduction <add>, %2, %cst [1, 2] : vector<1x16x128xf32> to vector<1xf32>
    %4 = vector.shape_cast %3 : vector<1xf32> to vector<1x1x1xf32>
    %5 = vector.extract %4[0, 0, 0] : f32 from vector<1x1x1xf32>
    %6 = arith.mulf %1, %1 : vector<16x128xf32>
    %7 = vector.shape_cast %6 : vector<16x128xf32> to vector<1x16x128xf32>
    %cst_2 = arith.constant dense<0.000000e+00> : vector<1xf32>
    %8 = vector.multi_reduction <add>, %7, %cst_2 [1, 2] : vector<1x16x128xf32> to vector<1xf32>
    %9 = vector.shape_cast %8 : vector<1xf32> to vector<1x1x1xf32>
    %10 = vector.extract %9[0, 0, 0] : f32 from vector<1x1x1xf32>
    %cst_3 = arith.constant 2.048000e+03 : f32
    %11 = arith.divf %5, %cst_3 : f32
    %cst_4 = arith.constant 2.048000e+03 : f32
    %12 = arith.divf %10, %cst_4 : f32
    %13 = arith.mulf %11, %11 : f32
    %14 = arith.subf %12, %13 : f32
    %cst_5 = arith.constant 0.000000e+00 : f32
    %15 = arith.maximumf %14, %cst_5 : f32
    %16 = vector.broadcast %11 : f32 to vector<16x128xf32>
    %17 = arith.subf %1, %16 : vector<16x128xf32>
    %cst_6 = arith.constant 9.99999997E-7 : f32
    %18 = arith.addf %15, %cst_6 : f32
    %19 = math.rsqrt %18 : f32
    %20 = vector.broadcast %19 : f32 to vector<16x128xf32>
    %21 = arith.mulf %17, %20 : vector<16x128xf32>
    %c0_7 = arith.constant 0 : index
    %c0_8 = arith.constant 0 : index
    %22 = vector.load %arg2[%c0_7, %c0_8] : memref<48x16xbf16, #tpu.memory_space<vmem>>, vector<48x16xbf16>
    %23 = arith.truncf %21 : vector<16x128xf32> to vector<16x128xbf16>
    %cst_9 = arith.constant dense<0.000000e+00> : vector<48x128xf32>
    %24 = tpu.matmul %22, %23, %cst_9 {dimension_numbers = #tpu.dot_dimension_numbers<[1], [0], [0], [1], [0, 0, 1, 1], [], []>} : vector<48x16xbf16>, vector<16x128xbf16>, vector<48x128xf32> -> vector<48x128xf32>
    %c0_10 = arith.constant 0 : index
    %c0_11 = arith.constant 0 : index
    %25 = vector.load %arg3[%c0_10, %c0_11] : memref<48x1xf32, #tpu.memory_space<vmem>>, vector<48x1xf32>
    %26 = vector.broadcast %25 : vector<48x1xf32> to vector<48x128xf32>
    %27 = arith.addf %24, %26 : vector<48x128xf32>
    %28 = vector.extract_strided_slice %27 {offsets = [0, 0], sizes = [16, 128], strides = [1, 1]} : vector<48x128xf32> to vector<16x128xf32>
    %29 = arith.truncf %28 : vector<16x128xf32> to vector<16x128xbf16>
    %30 = vector.extract_strided_slice %27 {offsets = [16, 0], sizes = [16, 128], strides = [1, 1]} : vector<48x128xf32> to vector<16x128xf32>
    %31 = arith.truncf %30 : vector<16x128xf32> to vector<16x128xbf16>
    %32 = vector.extract_strided_slice %27 {offsets = [32, 0], sizes = [16, 128], strides = [1, 1]} : vector<48x128xf32> to vector<16x128xf32>
    %33 = arith.truncf %32 : vector<16x128xf32> to vector<16x128xbf16>
    %cst_12 = arith.constant dense<0.000000e+00> : vector<128x128xf32>
    %34 = tpu.matmul %29, %31, %cst_12 {dimension_numbers = #tpu.dot_dimension_numbers<[0], [0], [1], [1], [0, 1, 1, 1], [], []>} : vector<16x128xbf16>, vector<16x128xbf16>, vector<128x128xf32> -> vector<128x128xf32>
    %cst_13 = arith.constant dense<0xFF800000> : vector<128xf32>
    %35 = vector.multi_reduction <maximumf>, %34, %cst_13 [1] : vector<128x128xf32> to vector<128xf32>
    %36 = vector.shape_cast %35 : vector<128xf32> to vector<128x1xf32>
    %37 = vector.broadcast %36 : vector<128x1xf32> to vector<128x128xf32>
    %38 = arith.subf %34, %37 : vector<128x128xf32>
    %39 = math.exp %38 : vector<128x128xf32>
    %cst_14 = arith.constant dense<0.000000e+00> : vector<128xf32>
    %40 = vector.multi_reduction <add>, %39, %cst_14 [1] : vector<128x128xf32> to vector<128xf32>
    %41 = vector.shape_cast %40 : vector<128xf32> to vector<128x1xf32>
    %42 = tpu.reciprocal %41 {approx = true} : vector<128x1xf32> -> vector<128x1xf32>
    %43 = vector.broadcast %42 : vector<128x1xf32> to vector<128x128xf32>
    %44 = arith.mulf %39, %43 : vector<128x128xf32>
    %45 = arith.truncf %44 : vector<128x128xf32> to vector<128x128xbf16>
    %cst_15 = arith.constant dense<0.000000e+00> : vector<16x128xf32>
    %46 = tpu.matmul %33, %45, %cst_15 {dimension_numbers = #tpu.dot_dimension_numbers<[1], [1], [0], [0], [0, 0, 1, 0], [], []>} : vector<16x128xbf16>, vector<128x128xbf16>, vector<16x128xf32> -> vector<16x128xf32>
    %47 = arith.addf %1, %46 : vector<16x128xf32>
    %c0_16 = arith.constant 0 : index
    %c0_17 = arith.constant 0 : index
    %48 = vector.load %arg4[%c0_16, %c0_17] : memref<16x1xf32, #tpu.memory_space<vmem>>, vector<16x1xf32>
    %49 = vector.broadcast %48 : vector<16x1xf32> to vector<16x128xf32>
    %50 = arith.addf %47, %49 : vector<16x128xf32>
    %c0_18 = arith.constant 0 : index
    %c0_19 = arith.constant 0 : index
    %c0_20 = arith.constant 0 : index
    %51 = vector.load %arg5[%c0_18, %c0_19, %c0_20] : memref<1x16x128xf32, #tpu.memory_space<vmem>>, vector<1x16x128xf32>
    %52 = vector.shape_cast %51 : vector<1x16x128xf32> to vector<16x128xf32>
    %53 = vector.shape_cast %50 : vector<16x128xf32> to vector<1x16x128xf32>
    tpu.vector_store %arg5[%c0_18, %c0_19, %c0_20], %53 {strides = array<i32>} : memref<1x16x128xf32, #tpu.memory_space<vmem>>, vector<1x16x128xf32>,
    return
  }
  func.func @transform_0(%arg0: i32) -> (i32, i32, i32) {
    %c0_i32 = arith.constant 0 : i32
    %c0_i32_0 = arith.constant 0 : i32
    %c0_i32_1 = arith.constant 0 : i32
    return %arg0, %c0_i32, %c0_i32_0 : i32, i32, i32
  }
  func.func @transform_1(%arg0: i32) -> (i32, i32) {
    %c0_i32 = arith.constant 0 : i32
    %c0_i32_0 = arith.constant 0 : i32
    %c0_i32_1 = arith.constant 0 : i32
    return %c0_i32, %c0_i32_0 : i32, i32
  }
  func.func @transform_2(%arg0: i32) -> (i32, i32) {
    %c0_i32 = arith.constant 0 : i32
    %c0_i32_0 = arith.constant 0 : i32
    %c0_i32_1 = arith.constant 0 : i32
    return %c0_i32, %c0_i32_0 : i32, i32
  }
  func.func @transform_3(%arg0: i32) -> (i32, i32) {
    %c0_i32 = arith.constant 0 : i32
    %c0_i32_0 = arith.constant 0 : i32
    %c0_i32_1 = arith.constant 0 : i32
    return %c0_i32, %c0_i32_0 : i32, i32
  }
  func.func @transform_4(%arg0: i32) -> (i32, i32, i32) {
    %c0_i32 = arith.constant 0 : i32
    %c0_i32_0 = arith.constant 0 : i32
    %c0_i32_1 = arith.constant 0 : i32
    return %arg0, %c0_i32, %c0_i32_0 : i32, i32, i32
  }
}

</mosaic_0001>

<llo_original>
// kernel: self_attention.1
$region0: #{self_attention.1}
  #allocation0 [shape = 'u32[]', space=smem, size = 0x4, offset = 0x4, fixed_abs, tag = 'smem constant byte address 0x4 - core index']
  #allocation1 [shape = 'u32[72,128]{1,0:T(1,128)}', space=vmem, size = 0x9000, scoped, tag = 'internal scratch']
  %s0 = inlined_call_operand.vmem [shape: f32[2,16,128], index: 0, kind: input, shape index: {}]
  %s1 = inlined_call_operand.vmem [shape: bf16[48,16], index: 1, kind: input, shape index: {}]
  %s2 = inlined_call_operand.vmem [shape: f32[48,1], index: 2, kind: input, shape index: {}]
  %s3 = inlined_call_operand.vmem [shape: f32[16,1], index: 3, kind: input, shape index: {}]
  %s4 = inlined_call_operand.vmem [shape: f32[2,16,128], index: 4, kind: output, shape index: {}]
  %s5 = sld [smem:[#allocation0]]
  $region49: #{self_attention.1} parent=0
    _
  %s7 = ssub.s32 1, %s5
  %s8 = scalar_select 0, %s7, %s5
  loop: start=0, step=1, limit=4
  $region2: #{self_attention.1} parent=0 // loop_pre_header
    _
  $region3: #{self_attention.1} parent=0 // loop_header
    %s10 = sphi 0, %s14
    %p11 = scmp.ge.s32.totalorder %s10, 4
    %s20 = sphi 0, %s22
    %s23 = sphi 0, %s20
    %s24 = sphi 0, %s23
    %s40 = sphi 0, %s24
    %s44 = sphi 0, %s44
    %s46 = sphi 0, %s44
    %s47 = sphi 0, %s46
    %s61 = sphi 0, %s47
    %s65 = sphi 0, %s65
    %s67 = sphi 0, %s65
    %s68 = sphi 0, %s67
    %s82 = sphi 0, %s68
    %s86 = sphi 0, %s86
    %s88 = sphi 0, %s86
    %s89 = sphi 0, %s88
    %s103 = sphi 0, %s89
    %s109 = sphi 0, %s111
    %s112 = sphi 0, %s109
    %s113 = sphi 0, %s112
    %s129 = sphi 0, %s113
  $region4: #{self_attention.1} parent=0 // loop_header_branch
    %13 = sbr.rel (%p11) target = $region8
  $region5: #{self_attention.1} parent=0 // loop_body
    %s15 = ssub.s32 %s10, 1
    %s16 = ssub.s32 %s10, 2
    %s17 = sadd.s32 %s10, 1
    %s18 = ssub.s32 %s10, %s17
    %p19 = scmp.eq.s32.totalorder %s18, 0
    %s21 = sadd.s32 %s20, 1
    %s22 = scalar_select %p19, %s20, %s21
    %p25 = pneg %p19
    %p26 = scmp.eq.s32.totalorder %s10, 1
    %p27 = por %p25, %p26
    %p28 = scmp.ne.s32.totalorder %s20, %s23
    %p29 = scmp.eq.s32.totalorder %s10, 0
    %p30 = por %p28, %p29
    %p31 = scmp.ne.s32.totalorder %s20, %s23
    %p32 = scmp.eq.s32.totalorder %s15, 1
    %p33 = por %p31, %p32
    %p34 = scmp.ne.s32.totalorder %s23, %s24
    %p35 = scmp.eq.s32.totalorder %s15, 0
    %p36 = por %p34, %p35
    %p37 = scmp.ne.s32.totalorder %s23, %s24
    %p38 = scmp.eq.s32.totalorder %s16, 1
    %p39 = por %p37, %p38
    %p41 = scmp.ne.s32.totalorder %s24, %s40
    %p42 = scmp.eq.s32.totalorder %s16, 0
    %p43 = por %p41, %p42
    %s45 = sadd.s32 %s44, 1
    %p48 = scmp.eq.s32.totalorder %s10, 1
    %p49 = scmp.ne.s32.totalorder %s44, %s46
    %p50 = scmp.eq.s32.totalorder %s10, 0
    %p51 = por %p49, %p50
    %p52 = scmp.ne.s32.totalorder %s44, %s46
    %p53 = scmp.eq.s32.totalorder %s15, 1
    %p54 = por %p52, %p53
    %p55 = scmp.ne.s32.totalorder %s46, %s47
    %p56 = scmp.eq.s32.totalorder %s15, 0
    %p57 = por %p55, %p56
    %p58 = scmp.ne.s32.totalorder %s46, %s47
    %p59 = scmp.eq.s32.totalorder %s16, 1
    %p60 = por %p58, %p59
    %p62 = scmp.ne.s32.totalorder %s47, %s61
    %p63 = scmp.eq.s32.totalorder %s16, 0
    %p64 = por %p62, %p63
    %s66 = sadd.s32 %s65, 1
    %p69 = scmp.eq.s32.totalorder %s10, 1
    %p70 = scmp.ne.s32.totalorder %s65, %s67
    %p71 = scmp.eq.s32.totalorder %s10, 0
    %p72 = por %p70, %p71
    %p73 = scmp.ne.s32.totalorder %s65, %s67
    %p74 = scmp.eq.s32.totalorder %s15, 1
    %p75 = por %p73, %p74
    %p76 = scmp.ne.s32.totalorder %s67, %s68
    %p77 = scmp.eq.s32.totalorder %s15, 0
    %p78 = por %p76, %p77
    %p79 = scmp.ne.s32.totalorder %s67, %s68
    %p80 = scmp.eq.s32.totalorder %s16, 1
    %p81 = por %p79, %p80
    %p83 = scmp.ne.s32.totalorder %s68, %s82
    %p84 = scmp.eq.s32.totalorder %s16, 0
    %p85 = por %p83, %p84
    %s87 = sadd.s32 %s86, 1
    %p90 = scmp.eq.s32.totalorder %s10, 1
    %p91 = scmp.ne.s32.totalorder %s86, %s88
    %p92 = scmp.eq.s32.totalorder %s10, 0
    %p93 = por %p91, %p92
    %p94 = scmp.ne.s32.totalorder %s86, %s88
    %p95 = scmp.eq.s32.totalorder %s15, 1
    %p96 = por %p94, %p95
    %p97 = scmp.ne.s32.totalorder %s88, %s89
    %p98 = scmp.eq.s32.totalorder %s15, 0
    %p99 = por %p97, %p98
    %p100 = scmp.ne.s32.totalorder %s88, %s89
    %p101 = scmp.eq.s32.totalorder %s16, 1
    %p102 = por %p100, %p101
    %p104 = scmp.ne.s32.totalorder %s89, %s103
    %p105 = scmp.eq.s32.totalorder %s16, 0
    %p106 = por %p104, %p105
    %s107 = ssub.s32 %s10, %s17
    %p108 = scmp.eq.s32.totalorder %s107, 0
    %s110 = sadd.s32 %s109, 1
    %s111 = scalar_select %p108, %s109, %s110
    %p114 = pneg %p108
    %p115 = scmp.eq.s32.totalorder %s10, 1
    %p116 = por %p114, %p115
    %p117 = scmp.ne.s32.totalorder %s109, %s112
    %p118 = scmp.eq.s32.totalorder %s10, 0
    %p119 = por %p117, %p118
    %p120 = scmp.ne.s32.totalorder %s109, %s112
    %p121 = scmp.eq.s32.totalorder %s15, 1
    %p122 = por %p120, %p121
    %p123 = scmp.ne.s32.totalorder %s112, %s113
    %p124 = scmp.eq.s32.totalorder %s15, 0
    %p125 = por %p123, %p124
    %p126 = scmp.ne.s32.totalorder %s112, %s113
    %p127 = scmp.eq.s32.totalorder %s16, 1
    %p128 = por %p126, %p127
    %p130 = scmp.ne.s32.totalorder %s113, %s129
    %p131 = scmp.eq.s32.totalorder %s16, 0
    %p132 = por %p130, %p131
    %p133 = scmp.le.s32.totalorder 1, %s10
    %p134 = scmp.lt.s32.totalorder %s10, 3
    %p135 = pnand %p133, %p134
    %p136 = pneg %p135
    // Predicated region
    $region9: #{self_attention.1} parent=5 // pred_check
      _
    $region10: #{self_attention.1} parent=5 // pred_check_branch
      %138 = sbr.rel (%p135) target = $region12
    $region11: #{self_attention.1} parent=5 // pred_region
      %s139 = ssub.s32 %s10, 1
      // Predicated region
      $region13: #{self_attention.1} parent=11 // pred_check
        %p140 = pneg %p57
      $region14: #{self_attention.1} parent=11 // pred_check_branch
        %142 = sbr.rel (%p140) target = $region16
      $region15: #{self_attention.1} parent=11 // pred_region
        _
      $region16: #{self_attention.1} parent=11 // pred_fallthru
        _
      // Predicated region
      $region17: #{self_attention.1} parent=11 // pred_check
        %p143 = pneg %p78
      $region18: #{self_attention.1} parent=11 // pred_check_branch
        %145 = sbr.rel (%p143) target = $region20
      $region19: #{self_attention.1} parent=11 // pred_region
        _
      $region20: #{self_attention.1} parent=11 // pred_fallthru
        _
      // Predicated region
      $region21: #{self_attention.1} parent=11 // pred_check
        %p146 = pneg %p99
      $region22: #{self_attention.1} parent=11 // pred_check_branch
        %148 = sbr.rel (%p146) target = $region24
      $region23: #{self_attention.1} parent=11 // pred_region
        _
      $region24: #{self_attention.1} parent=11 // pred_fallthru
        _
    $region12: #{self_attention.1} parent=5 // pred_fallthru
      _
    %p149 = scmp.lt.s32.totalorder %s10, 2
    // Predicated region
    $region25: #{self_attention.1} parent=5 // pred_check
      %p150 = pneg %p149
    $region26: #{self_attention.1} parent=5 // pred_check_branch
      %152 = sbr.rel (%p150) target = $region28
    $region27: #{self_attention.1} parent=5 // pred_region
      // Predicated region
      $region29: #{self_attention.1} parent=27 // pred_check
        %p153 = pneg %p30
      $region30: #{self_attention.1} parent=27 // pred_check_branch
        %155 = sbr.rel (%p153) target = $region32
      $region31: #{self_attention.1} parent=27 // pred_region
        %p156 = scmp.lt.s32.totalorder %s10, 1
        %s157 = scalar_select %p156, %s10, 1
        %s158 = smul.addr %s157, 2
        %s159 = smul.addr %s158, 8
        %s160 = scalar_lea.vmem %s0, %s159
      $region32: #{self_attention.1} parent=27 // pred_fallthru
        _
    $region28: #{self_attention.1} parent=5 // pred_fallthru
      _
    %p161 = scmp.le.s32.totalorder 1, %s10
    %p162 = scmp.lt.s32.totalorder %s10, 3
    %p163 = pnand %p161, %p162
    %p164 = pneg %p163
    // Predicated region
    $region33: #{self_attention.1} parent=5 // pred_check
      _
    $region34: #{self_attention.1} parent=5 // pred_check_branch
      %166 = sbr.rel (%p163) target = $region36
    $region35: #{self_attention.1} parent=5 // pred_region
      %s167 = ssub.s32 %s10, 1
      %p168 = scmp.lt.s32.totalorder %s15, 1
      %s169 = scalar_select %p168, %s15, 1
      %s170 = smul.addr %s169, 2
      %s171 = smul.addr %s170, 8
      %s172 = scalar_lea.vmem %s0, %s171
      %p173 = pneg %p36
      %p174 = pneg %p33
      %p175 = pneg %p57
      %p176 = pneg %p54
      %p177 = pneg %p78
      %p178 = pneg %p75
      %p179 = pneg %p99
      %p180 = pneg %p96
      %p181 = pneg %p125
      %p182 = pneg %p122
      %p183 = scmp.lt.s32.totalorder %s15, 1
      %s184 = scalar_select %p183, %s15, 1
      %s185 = smul.addr %s184, 2
      %s186 = smul.addr %s185, 8
      %s187 = scalar_lea.vmem %s4, %s186
      %p188 = scmp.lt.s32.totalorder %s15, 1
      %s189 = scalar_select %p188, %s15, 1
      %s190 = smul.addr %s189, 2
      %s191 = smul.addr %s190, 8
      %s192 = scalar_lea.vmem %s0, %s191
      %p193 = scmp.lt.s32.totalorder %s15, 1
      %s194 = scalar_select %p193, %s15, 1
      %s195 = smul.addr %s194, 2
      %s196 = smul.addr %s195, 8
      %s197 = scalar_lea.vmem %s4, %s196
      %v199 = vld [vmem:[%s192] sm:$0xff]
      %v200 = vld [vmem:[%s192 + $0x8] sm:$0xff]
      %v201 = vadd.f32 %v199, %v200
      %202 = vadd.xlane.f32.xlu0 %v201
      %v203 = vpop.xlane.xlu0 %202
      %v204 = vrot.slane %v203, 4
      %v205 = vadd.f32 %v203, %v204
      %v206 = vrot.slane %v205, 2
      %v207 = vadd.f32 %v205, %v206
      %v208 = vrot.slane %v207, 1
      %v209 = vadd.f32 %v207, %v208
      %s210 = vtos %v209
      %v211 = vmul.f32 %v199, %v199
      %v212 = vmul.f32 %v200, %v200
      %v213 = vadd.f32 %v211, %v212
      %214 = vadd.xlane.f32.xlu0 %v213
      %v215 = vpop.xlane.xlu0 %214
      %v216 = vrot.slane %v215, 4
      %v217 = vadd.f32 %v215, %v216
      %v218 = vrot.slane %v217, 2
      %v219 = vadd.f32 %v217, %v218
      %v220 = vrot.slane %v219, 1
      %v221 = vadd.f32 %v219, %v220
      %s222 = vtos %v221
      %v223 = vrcp.pop 2048.0
      %v224 = vmul.f32 2048.0, %v223
      %v225 = vsub.f32 1.0, %v224
      %v226 = vmul.f32 %v223, %v225
      %v227 = vadd.f32 %v223, %v226
      %vm228 = vweird.f32 %v223
      %v229 = vsel %vm228, %v223, %v227
      %s230 = vtos %v229
      %s231 = smul.f32 %s210, %s230
      %v232 = vrcp.pop 2048.0
      %v233 = vmul.f32 2048.0, %v232
      %v234 = vsub.f32 1.0, %v233
      %v235 = vmul.f32 %v232, %v234
      %v236 = vadd.f32 %v232, %v235
      %vm237 = vweird.f32 %v232
      %v238 = vsel %vm237, %v232, %v236
      %s239 = vtos %v238
      %s240 = smul.f32 %s222, %s239
      %s241 = smul.f32 %s231, %s231
      %s242 = ssub.f32 %s240, %s241
      %s243 = smax.f32 %s242, 0.0
      %v244 = vstv %s231
      %v245 = vsub.f32 %v199, %v244
      %v246 = vsub.f32 %v200, %v244
      %s247 = sadd.f32 %s243, 1e-06
      %v248 = vstv %s247
      %v249 = vrsqrt.pop %v248
      %v250 = vmul.f32 %v249, %v248
      %v251 = vmul.f32 %v250, %v249
      %v252 = vmul.f32 0.5, %v251
      %v253 = vsub.f32 1.5, %v252
      %v254 = vmul.f32 %v249, %v253
      %vm255 = vweird.f32 %v248
      %vm256 = vweird.f32 %v249
      %vm257 = vmor %vm255, %vm256
      %v258 = vsel %vm257, %v249, %v254
      %s259 = vtos %v258
      %v260 = vstv %s259
      %v261 = vmul.f32 %v245, %v260
      %v262 = vmul.f32 %v246, %v260
      %v263 = vld [vmem:[%s1] sm:$0xf]
      %v264 = vld [vmem:[%s1 + $0x4] sm:$0xf]
      %v265 = vld [vmem:[%s1 + $0x8] sm:$0xf]
      %v266 = vld [vmem:[%s1 + $0xc] sm:$0xf]
      %v267 = vld [vmem:[%s1 + $0x10] sm:$0xf]
      %v268 = vld [vmem:[%s1 + $0x14] sm:$0xf]
      %v269 = vpack.c.bf16 %v262, %v261
      %v270 = vld [vmem:[%s2] sm:$0xff]
      %v271 = vld [vmem:[%s2 + $0x8] sm:$0xff]
      %v272 = vld [vmem:[%s2 + $0x10] sm:$0xff]
      %v273 = vld [vmem:[%s2 + $0x18] sm:$0xff]
      %v274 = vld [vmem:[%s2 + $0x20] sm:$0xff]
      %v275 = vld [vmem:[%s2 + $0x28] sm:$0xff]
      %277 = vset.pattern.permute.xlu0 0
      %278 = vperm.xlu0 %277, %v270
      %v279 = vpop.permute.xlu0 %278
      %282 = vset.pattern.permute.xlu0 0
      %283 = vperm.xlu0 %282, %v271
      %v284 = vpop.permute.xlu0 %283
      %287 = vset.pattern.permute.xlu0 0
      %288 = vperm.xlu0 %287, %v272
      %v289 = vpop.permute.xlu0 %288
      %292 = vset.pattern.permute.xlu0 0
      %293 = vperm.xlu0 %292, %v273
      %v294 = vpop.permute.xlu0 %293
      %297 = vset.pattern.permute.xlu0 0
      %298 = vperm.xlu0 %297, %v274
      %v299 = vpop.permute.xlu0 %298
      %302 = vset.pattern.permute.xlu0 0
      %303 = vperm.xlu0 %302, %v275
      %v304 = vpop.permute.xlu0 %303
      %v312 = vunpack.c.l.b16 %v263
      %v313 = vunpack.c.l.b16 %v264
      %v314 = vunpack.c.l.b16 %v265
      %v315 = vunpack.c.l.b16 %v266
      %v316 = vunpack.c.l.b16 %v267
      %v317 = vunpack.c.l.b16 %v268
      %v318 = vpack.c.b16 %v313, %v312
      %v319 = vpack.c.b16 %v315, %v314
      %v320 = vpack.c.b16 %v317, %v316
      %vm321 = vcmask 130048
      %v323 = vsel %vm321, %v318, 0
      %v326 = vsel %vm321, %v319, 0
      %v329 = vsel %vm321, %v320, 0
      %331 = vmatpush.bf16.msra.mxu0 0
      %332 = vmatpush.bf16.msra.mxu0 0
      %333 = vmatpush.bf16.msra.mxu0 0
      %334 = vmatpush.bf16.msra.mxu0 0
      %335 = vmatpush.bf16.msra.mxu0 0
      %336 = vmatpush.bf16.msra.mxu0 0
      %337 = vmatpush.bf16.msra.mxu0 0
      %338 = vmatpush.bf16.msra.mxu0 %v269
      %339 = vmatmul.bf16.gmra.mxu0 %v323
      %v340 = vpop.f32.mrf.mxu0
      %v341 = vadd.f32 %v279, %v340
      %v342 = vpop.f32.mrf.mxu0
      %v343 = vadd.f32 %v284, %v342
      %344 = vmatmul.bf16.gmra.mxu0 %v326
      %v345 = vpop.f32.mrf.mxu0
      %v346 = vadd.f32 %v289, %v345
      %v347 = vpop.f32.mrf.mxu0
      %v348 = vadd.f32 %v294, %v347
      %349 = vmatmul.bf16.gmra.mxu0 %v329
      %v350 = vpop.f32.mrf.mxu0
      %v351 = vadd.f32 %v299, %v350
      %v352 = vpop.f32.mrf.mxu0
      %v353 = vadd.f32 %v304, %v352
      %354 = vdwg.mxu0
      %v355 = vpack.c.bf16 %v343, %v341
      %v356 = vpack.c.bf16 %v348, %v346
      %v357 = vpack.c.bf16 %v353, %v351
      %358 = vxpose.xlu0.c.b16.start [1/8] %v355, 128
      %359 = vxpose.xlu0.c.b16.cont [2/8] 0, 128
      %360 = vxpose.xlu0.c.b16.cont [3/8] 0, 128
      %361 = vxpose.xlu0.c.b16.cont [4/8] 0, 128
      %362 = vxpose.xlu0.c.b16.cont [5/8] 0, 128
      %363 = vxpose.xlu0.c.b16.cont [6/8] 0, 128
      %364 = vxpose.xlu0.c.b16.cont [7/8] 0, 128
      %365 = vxpose.xlu0.c.b16.end [8/8] 0, 128
      %v366 = vpop.trf.xlu0
      %v367 = vpop.trf.xlu0
      %v368 = vpop.trf.xlu0
      %v369 = vpop.trf.xlu0
      %v370 = vpop.trf.xlu0
      %v371 = vpop.trf.xlu0
      %v372 = vpop.trf.xlu0
      %v373 = vpop.trf.xlu0
      %v375 = vsel %vm321, %v366, 0
      %v378 = vsel %vm321, %v367, 0
      %v381 = vsel %vm321, %v368, 0
      %v384 = vsel %vm321, %v369, 0
      %v387 = vsel %vm321, %v370, 0
      %v390 = vsel %vm321, %v371, 0
      %v393 = vsel %vm321, %v372, 0
      %v396 = vsel %vm321, %v373, 0
      %398 = vmatpush.bf16.msra.mxu0 0
      %399 = vmatpush.bf16.msra.mxu0 0
      %400 = vmatpush.bf16.msra.mxu0 0
      %401 = vmatpush.bf16.msra.mxu0 0
      %402 = vmatpush.bf16.msra.mxu0 0
      %403 = vmatpush.bf16.msra.mxu0 0
      %404 = vmatpush.bf16.msra.mxu0 0
      %405 = vmatpush.bf16.msra.mxu0 %v356
      %406 = vmatmul.bf16.gmra.mxu0 %v375
      %v407 = vpop.f32.mrf.mxu0
      %v408 = vadd.f32 0.0, %v407
      %v409 = vpop.f32.mrf.mxu0
      %v410 = vadd.f32 0.0, %v409
      %411 = vmatmul.bf16.gmra.mxu0 %v378
      %v412 = vpop.f32.mrf.mxu0
      %v413 = vadd.f32 0.0, %v412
      %v414 = vpop.f32.mrf.mxu0
      %v415 = vadd.f32 0.0, %v414
      %416 = vmatmul.bf16.gmra.mxu0 %v381
      %v417 = vpop.f32.mrf.mxu0
      %v418 = vadd.f32 0.0, %v417
      %v419 = vpop.f32.mrf.mxu0
      %v420 = vadd.f32 0.0, %v419
      %421 = vmatmul.bf16.gmra.mxu0 %v384
      %v422 = vpop.f32.mrf.mxu0
      %v423 = vadd.f32 0.0, %v422
      %v424 = vpop.f32.mrf.mxu0
      %v425 = vadd.f32 0.0, %v424
      %426 = vmatmul.bf16.gmra.mxu0 %v387
      %v427 = vpop.f32.mrf.mxu0
      %v428 = vadd.f32 0.0, %v427
      %v429 = vpop.f32.mrf.mxu0
      %v430 = vadd.f32 0.0, %v429
      %431 = vmatmul.bf16.gmra.mxu0 %v390
      %v432 = vpop.f32.mrf.mxu0
      %v433 = vadd.f32 0.0, %v432
      %v434 = vpop.f32.mrf.mxu0
      %v435 = vadd.f32 0.0, %v434
      %436 = vmatmul.bf16.gmra.mxu0 %v393
      %v437 = vpop.f32.mrf.mxu0
      %v438 = vadd.f32 0.0, %v437
      %v439 = vpop.f32.mrf.mxu0
      %v440 = vadd.f32 0.0, %v439
      %441 = vmatmul.bf16.gmra.mxu0 %v396
      %v442 = vpop.f32.mrf.mxu0
      %v443 = vadd.f32 0.0, %v442
      %v444 = vpop.f32.mrf.mxu0
      %v445 = vadd.f32 0.0, %v444
      %446 = vdwg.mxu0
      %447 = vmax.xlane.f32.xlu0 %v408
      %v448 = vpop.xlane.xlu0 %447
      %449 = vmax.xlane.f32.xlu0 %v410
      %v450 = vpop.xlane.xlu0 %449
      %451 = vmax.xlane.f32.xlu0 %v413
      %v452 = vpop.xlane.xlu0 %451
      %453 = vmax.xlane.f32.xlu0 %v415
      %v454 = vpop.xlane.xlu0 %453
      %455 = vmax.xlane.f32.xlu0 %v418
      %v456 = vpop.xlane.xlu0 %455
      %457 = vmax.xlane.f32.xlu0 %v420
      %v458 = vpop.xlane.xlu0 %457
      %459 = vmax.xlane.f32.xlu0 %v423
      %v460 = vpop.xlane.xlu0 %459
      %461 = vmax.xlane.f32.xlu0 %v425
      %v462 = vpop.xlane.xlu0 %461
      %463 = vmax.xlane.f32.xlu0 %v428
      %v464 = vpop.xlane.xlu0 %463
      %465 = vmax.xlane.f32.xlu0 %v430
      %v466 = vpop.xlane.xlu0 %465
      %467 = vmax.xlane.f32.xlu0 %v433
      %v468 = vpop.xlane.xlu0 %467
      %469 = vmax.xlane.f32.xlu0 %v435
      %v470 = vpop.xlane.xlu0 %469
      %471 = vmax.xlane.f32.xlu0 %v438
      %v472 = vpop.xlane.xlu0 %471
      %473 = vmax.xlane.f32.xlu0 %v440
      %v474 = vpop.xlane.xlu0 %473
      %475 = vmax.xlane.f32.xlu0 %v443
      %v476 = vpop.xlane.xlu0 %475
      %477 = vmax.xlane.f32.xlu0 %v445
      %v478 = vpop.xlane.xlu0 %477
      %v479 = vsub.f32 %v408, %v448
      %v480 = vsub.f32 %v410, %v450
      %v481 = vsub.f32 %v413, %v452
      %v482 = vsub.f32 %v415, %v454
      %v483 = vsub.f32 %v418, %v456
      %v484 = vsub.f32 %v420, %v458
      %v485 = vsub.f32 %v423, %v460
      %v486 = vsub.f32 %v425, %v462
      %v487 = vsub.f32 %v428, %v464
      %v488 = vsub.f32 %v430, %v466
      %v489 = vsub.f32 %v433, %v468
      %v490 = vsub.f32 %v435, %v470
      %v491 = vsub.f32 %v438, %v472
      %v492 = vsub.f32 %v440, %v474
      %v493 = vsub.f32 %v443, %v476
      %v494 = vsub.f32 %v445, %v478
      %v495 = vmul.f32 %v479, 1.442695
      %v496 = vpow.pop %v495
      %v497 = vmul.f32 %v480, 1.442695
      %v498 = vpow.pop %v497
      %v499 = vmul.f32 %v481, 1.442695
      %v500 = vpow.pop %v499
      %v501 = vmul.f32 %v482, 1.442695
      %v502 = vpow.pop %v501
      %v503 = vmul.f32 %v483, 1.442695
      %v504 = vpow.pop %v503
      %v505 = vmul.f32 %v484, 1.442695
      %v506 = vpow.pop %v505
      %v507 = vmul.f32 %v485, 1.442695
      %v508 = vpow.pop %v507
      %v509 = vmul.f32 %v486, 1.442695
      %v510 = vpow.pop %v509
      %v511 = vmul.f32 %v487, 1.442695
      %v512 = vpow.pop %v511
      %v513 = vmul.f32 %v488, 1.442695
      %v514 = vpow.pop %v513
      %v515 = vmul.f32 %v489, 1.442695
      %v516 = vpow.pop %v515
      %v517 = vmul.f32 %v490, 1.442695
      %v518 = vpow.pop %v517
      %v519 = vmul.f32 %v491, 1.442695
      %v520 = vpow.pop %v519
      %v521 = vmul.f32 %v492, 1.442695
      %v522 = vpow.pop %v521
      %v523 = vmul.f32 %v493, 1.442695
      %v524 = vpow.pop %v523
      %v525 = vmul.f32 %v494, 1.442695
      %v526 = vpow.pop %v525
      %527 = vadd.xlane.f32.xlu0 %v496
      %v528 = vpop.xlane.xlu0 %527
      %529 = vadd.xlane.f32.xlu0 %v498
      %v530 = vpop.xlane.xlu0 %529
      %531 = vadd.xlane.f32.xlu0 %v500
      %v532 = vpop.xlane.xlu0 %531
      %533 = vadd.xlane.f32.xlu0 %v502
      %v534 = vpop.xlane.xlu0 %533
      %535 = vadd.xlane.f32.xlu0 %v504
      %v536 = vpop.xlane.xlu0 %535
      %537 = vadd.xlane.f32.xlu0 %v506
      %v538 = vpop.xlane.xlu0 %537
      %539 = vadd.xlane.f32.xlu0 %v508
      %v540 = vpop.xlane.xlu0 %539
      %541 = vadd.xlane.f32.xlu0 %v510
      %v542 = vpop.xlane.xlu0 %541
      %543 = vadd.xlane.f32.xlu0 %v512
      %v544 = vpop.xlane.xlu0 %543
      %545 = vadd.xlane.f32.xlu0 %v514
      %v546 = vpop.xlane.xlu0 %545
      %547 = vadd.xlane.f32.xlu0 %v516
      %v548 = vpop.xlane.xlu0 %547
      %549 = vadd.xlane.f32.xlu0 %v518
      %v550 = vpop.xlane.xlu0 %549
      %551 = vadd.xlane.f32.xlu0 %v520
      %v552 = vpop.xlane.xlu0 %551
      %553 = vadd.xlane.f32.xlu0 %v522
      %v554 = vpop.xlane.xlu0 %553
      %555 = vadd.xlane.f32.xlu0 %v524
      %v556 = vpop.xlane.xlu0 %555
      %557 = vadd.xlane.f32.xlu0 %v526
      %v558 = vpop.xlane.xlu0 %557
      %v559 = vrcp.pop %v528
      %v560 = vrcp.pop %v530
      %v561 = vrcp.pop %v532
      %v562 = vrcp.pop %v534
      %v563 = vrcp.pop %v536
      %v564 = vrcp.pop %v538
      %v565 = vrcp.pop %v540
      %v566 = vrcp.pop %v542
      %v567 = vrcp.pop %v544
      %v568 = vrcp.pop %v546
      %v569 = vrcp.pop %v548
      %v570 = vrcp.pop %v550
      %v571 = vrcp.pop %v552
      %v572 = vrcp.pop %v554
      %v573 = vrcp.pop %v556
      %v574 = vrcp.pop %v558
      %v575 = vmul.f32 %v496, %v559
      %v576 = vmul.f32 %v498, %v560
      %v577 = vmul.f32 %v500, %v561
      %v578 = vmul.f32 %v502, %v562
      %v579 = vmul.f32 %v504, %v563
      %v580 = vmul.f32 %v506, %v564
      %v581 = vmul.f32 %v508, %v565
      %v582 = vmul.f32 %v510, %v566
      %v583 = vmul.f32 %v512, %v567
      %v584 = vmul.f32 %v514, %v568
      %v585 = vmul.f32 %v516, %v569
      %v586 = vmul.f32 %v518, %v570
      %v587 = vmul.f32 %v520, %v571
      %v588 = vmul.f32 %v522, %v572
      %v589 = vmul.f32 %v524, %v573
      %v590 = vmul.f32 %v526, %v574
      %v591 = vpack.c.bf16 %v576, %v575
      %v592 = vpack.c.bf16 %v578, %v577
      %v593 = vpack.c.bf16 %v580, %v579
      %v594 = vpack.c.bf16 %v582, %v581
      %v595 = vpack.c.bf16 %v584, %v583
      %v596 = vpack.c.bf16 %v586, %v585
      %v597 = vpack.c.bf16 %v588, %v587
      %v598 = vpack.c.bf16 %v590, %v589
      %599 = vmatpush.bf16.xpose.msra.mxu0 %v598
      %600 = vmatpush.bf16.xpose.msra.mxu0 %v597
      %601 = vmatpush.bf16.xpose.msra.mxu0 %v596
      %602 = vmatpush.bf16.xpose.msra.mxu0 %v595
      %603 = vmatpush.bf16.xpose.msra.mxu0 %v594
      %604 = vmatpush.bf16.xpose.msra.mxu0 %v593
      %605 = vmatpush.bf16.xpose.msra.mxu0 %v592
      %606 = vmatpush.bf16.xpose.msra.mxu0 %v591
      %607 = vmatmul.bf16.gmra.mxu0 %v357
      %v608 = vpop.f32.mrf.mxu0
      %v609 = vadd.f32 0.0, %v608
      %v610 = vpop.f32.mrf.mxu0
      %v611 = vadd.f32 0.0, %v610
      %612 = vdwg.mxu0
      %v613 = vadd.f32 %v199, %v609
      %v614 = vadd.f32 %v200, %v611
      %v615 = vld [vmem:[%s3] sm:$0xff]
      %v616 = vld [vmem:[%s3 + $0x8] sm:$0xff]
      %618 = vset.pattern.permute.xlu0 0
      %619 = vperm.xlu0 %618, %v615
      %v620 = vpop.permute.xlu0 %619
      %623 = vset.pattern.permute.xlu0 0
      %624 = vperm.xlu0 %623, %v616
      %v625 = vpop.permute.xlu0 %624
      %v627 = vadd.f32 %v613, %v620
      %v628 = vadd.f32 %v614, %v625
      %629 = vst [vmem:[%s197] sm:$0xff] %v627
      %630 = vst [vmem:[%s197 + $0x8] sm:$0xff] %v628
      %p631 = scmp.lt.s32.totalorder %s15, 1
      %s632 = scalar_select %p631, %s15, 1
      %s633 = smul.addr %s632, 2
      %s634 = smul.addr %s633, 8
      %s635 = scalar_lea.vmem %s4, %s634
      // Predicated region
      $region37: #{self_attention.1} parent=35 // pred_check
        %p636 = pneg %p122
      $region38: #{self_attention.1} parent=35 // pred_check_branch
        %638 = sbr.rel (%p636) target = $region40
      $region39: #{self_attention.1} parent=35 // pred_region
        _
      $region40: #{self_attention.1} parent=35 // pred_fallthru
        _
    $region36: #{self_attention.1} parent=5 // pred_fallthru
      _
    %p639 = scmp.le.s32.totalorder 2, %s10
    // Predicated region
    $region41: #{self_attention.1} parent=5 // pred_check
      %p640 = pneg %p639
    $region42: #{self_attention.1} parent=5 // pred_check_branch
      %642 = sbr.rel (%p640) target = $region44
    $region43: #{self_attention.1} parent=5 // pred_region
      %s643 = ssub.s32 %s10, 2
      // Predicated region
      $region45: #{self_attention.1} parent=43 // pred_check
        %p644 = pneg %p128
      $region46: #{self_attention.1} parent=43 // pred_check_branch
        %646 = sbr.rel (%p644) target = $region48
      $region47: #{self_attention.1} parent=43 // pred_region
        %p647 = scmp.lt.s32.totalorder %s16, 1
        %s648 = scalar_select %p647, %s16, 1
        %s649 = smul.addr %s648, 2
        %s650 = smul.addr %s649, 8
        %s651 = scalar_lea.vmem %s4, %s650
      $region48: #{self_attention.1} parent=43 // pred_fallthru
        _
    $region44: #{self_attention.1} parent=5 // pred_fallthru
      _
  $region6: #{self_attention.1} parent=0 // loop_footer
    %s14 = sadd.s32 1, %s10
  $region7: #{self_attention.1} parent=0 // loop_footer_branch
    %9 = sbr.rel target = $region3
  $region8: #{self_attention.1} parent=0 // loop_exit
    _

</llo_original>
